<compile_context>
chip_gen: v6e
topology: v6e:2x2x1
jax: 0.10.0
libtpu: 0.0.40
codegen_flags: <defaults>
</compile_context>

<pallas_src>
import jax
import jax.numpy as jnp
from jax.experimental import pallas as pl
from jax.experimental.pallas import tpu as pltpu


def _make_mlp_kernel(num_layers, fma_first_layer):
    """Builds a fused kernel for `num_layers` pointwise-conv layers."""

    def kernel(x_ref, *refs):
        o_ref = refs[-1]
        params = refs[:-1]            # (w0, b0, w1, b1, ..., w_{n-1}, b_{n-1})

        h = x_ref[0]                  # (C_in, TILE_L), f32

        for i in range(num_layers):
            w_ref = params[2 * i]     # (out_i, in_i)  bf16
            b_ref = params[2 * i + 1]  # (out_i, 1)    f32

            if i == 0 and fma_first_layer:
                # Tiny contraction (K = C_in <= 8): unrolled VPU broadcast-FMAs,
                # keeps the MXU free and avoids the K->128 pad.
                w = w_ref[...].astype(jnp.float32)      # (C0, C_in)
                xf = h.astype(jnp.float32)              # (C_in, TILE_L)
                in_c = w.shape[1]
                acc = w[:, 0:1] * xf[0:1, :]
                for c in range(1, in_c):
                    acc = acc + w[:, c:c + 1] * xf[c:c + 1, :]
                h = acc + b_ref[...]
            else:
                # bf16 MXU matmul, f32 accumulation; bias add in f32.
                h = jnp.dot(
                    w_ref[...],
                    h.astype(jnp.bfloat16),
                    preferred_element_type=jnp.float32,
                ) + b_ref[...]

            if i < num_layers - 1:
                # Dropout (eval mode) = identity, then ReLU.
                h = jnp.maximum(h, 0.0)

        o_ref[0] = h.astype(o_ref.dtype)

    return kernel


def mlp_forward(x_ncl, weights, biases, *, tile_l=1024):
    """Forward pass of _MLPModule (eval mode).

    x_ncl:      (N, C_in, L) float32  (PyTorch NCL layout)
    weights[k]: (out_k, in_k) float32 (PyTorch Conv1d weight squeezed over k=1)
    biases[k]:  (out_k,)     float32
    Returns (N, num_classes, L) float32.
    """
    N, C_in, L = x_ncl.shape
    num_layers = len(weights)
    num_classes = weights[-1].shape[0]

    # Pad L up to a multiple of 128 lanes, then to a multiple of the tile.
    l_pad = pl.cdiv(L, 128) * 128
    tile_l = min(tile_l, l_pad)
    l_pad = pl.cdiv(l_pad, tile_l) * tile_l
    x_p = x_ncl if l_pad == L else jnp.pad(x_ncl, ((0, 0), (0, 0), (0, l_pad - L)))

    # Params: weights in bf16 (MXU-native), biases as f32 column vectors.
    w_bf16 = [w.astype(jnp.bfloat16) for w in weights]
    b_col = [b.reshape(-1, 1).astype(jnp.float32) for b in biases]

    grid = (N, l_pad // tile_l)

    in_specs = [pl.BlockSpec((1, C_in, tile_l), lambda n, l: (n, 0, l))]
    args = [x_p]
    for w, b in zip(w_bf16, b_col):
        in_specs.append(pl.BlockSpec(w.shape, lambda n, l: (0, 0)))  # VMEM-resident
        in_specs.append(pl.BlockSpec(b.shape, lambda n, l: (0, 0)))
        args.extend([w, b])

    out_specs = pl.BlockSpec((1, num_classes, tile_l), lambda n, l: (n, 0, l))
    out_shape = jax.ShapeDtypeStruct((N, num_classes, l_pad), jnp.float32)

    kernel = _make_mlp_kernel(num_layers, fma_first_layer=(C_in <= 8))

    out = pl.pallas_call(
        kernel,
        out_shape=out_shape,
        grid=grid,
        in_specs=in_specs,
        out_specs=out_specs,
        compiler_params=pltpu.CompilerParams(
            dimension_semantics=("parallel", "parallel"),
            vmem_limit_bytes=32 * 1024 * 1024,
        ),
    )(*args)

    return out[:, :, :L] if l_pad != L else out


if __name__ == "__main__":
    key = jax.random.PRNGKey(0)

    # Module config (mirrors _MLPModule.__init__):
    #   input_dims = {"feat": (4,)}  -> input channels = 4
    #   f_maps_list = [32, 32], num_classes = 5
    C_in = 4
    f_maps_list = [32, 32]
    num_classes = 5
    N, L = 2, 16

    in_f_maps = [C_in] + f_maps_list
    out_f_maps = f_maps_list + [num_classes]

    # Deterministic params.  Conv1d weight (out, in, 1) -> stored as (out, in).
    weights, biases = [], []
    k = key
    for fin, fout in zip(in_f_maps, out_f_maps):
        k, kw, kb = jax.random.split(k, 3)
        weights.append(jax.random.normal(kw, (fout, fin), dtype=jnp.float32) * 0.1)
        biases.append(jax.random.normal(kb, (fout,), dtype=jnp.float32) * 0.1)

    k, kx = jax.random.split(k)
    x = jax.random.normal(kx, (N, C_in, L), dtype=jnp.float32)

    y = mlp_forward(x, weights, biases)
    y = jax.block_until_ready(y)

    # Plain-JAX f32 reference of the same forward pass (eval-mode dropout).
    h = x
    for i, (w, b) in enumerate(zip(weights, biases)):
        h = jnp.einsum("oc,ncl->nol", w, h) + b.reshape(1, -1, 1)
        if i < len(weights) - 1:
            h = jnp.maximum(h, 0.0)
    ref = h

    assert y.shape == (N, num_classes, L), y.shape
    # bf16 matmuls (f32 accumulate) -> allow small deviation from the f32 ref.
    max_err = float(jnp.max(jnp.abs(y - ref)))
    assert jnp.allclose(y, ref, atol=2e-2, rtol=2e-2), max_err

    print("KERNEL_OK")
</pallas_src>

<mosaic_0001>
module attributes {stable_mosaic.version = 11 : i64} {
  func.func @kernel(%arg0: i32, %arg1: i32, %arg2: memref<1x4x128xf32, #tpu.memory_space<vmem>>, %arg3: memref<32x4xbf16, #tpu.memory_space<vmem>>, %arg4: memref<32x1xf32, #tpu.memory_space<vmem>>, %arg5: memref<32x32xbf16, #tpu.memory_space<vmem>>, %arg6: memref<32x1xf32, #tpu.memory_space<vmem>>, %arg7: memref<5x32xbf16, #tpu.memory_space<vmem>>, %arg8: memref<5x1xf32, #tpu.memory_space<vmem>>, %arg9: memref<1x5x128xf32, #tpu.memory_space<vmem>>) attributes {dimension_semantics = [#tpu.dimension_semantics<parallel>, #tpu.dimension_semantics<parallel>], iteration_bounds = array<i64: 2, 1>, scalar_prefetch = 0 : i64, scratch_operands = 0 : i64, tpu.core_type = #tpu.core_type<tc>, window_params = [{transform_indices = @transform_0, window_bounds = array<i64: 1, 4, 128>}, {pipeline_mode = #tpu.pipeline_mode<synchronous>, transform_indices = @transform_1, window_bounds = array<i64: 32, 4>}, {pipeline_mode = #tpu.pipeline_mode<synchronous>, transform_indices = @transform_2, window_bounds = array<i64: 32, 1>}, {pipeline_mode = #tpu.pipeline_mode<synchronous>, transform_indices = @transform_3, window_bounds = array<i64: 32, 32>}, {pipeline_mode = #tpu.pipeline_mode<synchronous>, transform_indices = @transform_4, window_bounds = array<i64: 32, 1>}, {pipeline_mode = #tpu.pipeline_mode<synchronous>, transform_indices = @transform_5, window_bounds = array<i64: 5, 32>}, {pipeline_mode = #tpu.pipeline_mode<synchronous>, transform_indices = @transform_6, window_bounds = array<i64: 5, 1>}, {transform_indices = @transform_7, window_bounds = array<i64: 1, 5, 128>}]} {
    %c0 = arith.constant 0 : index
    %c0_0 = arith.constant 0 : index
    %c0_1 = arith.constant 0 : index
    %0 = vector.load %arg2[%c0, %c0_0, %c0_1] : memref<1x4x128xf32, #tpu.memory_space<vmem>>, vector<1x4x128xf32>
    %1 = vector.shape_cast %0 : vector<1x4x128xf32> to vector<4x128xf32>
    %c0_2 = arith.constant 0 : index
    %c0_3 = arith.constant 0 : index
    %2 = vector.load %arg3[%c0_2, %c0_3] : memref<32x4xbf16, #tpu.memory_space<vmem>>, vector<32x4xbf16>
    %3 = arith.extf %2 : vector<32x4xbf16> to vector<32x4xf32>
    %4 = vector.extract_strided_slice %3 {offsets = [0, 0], sizes = [32, 1], strides = [1, 1]} : vector<32x4xf32> to vector<32x1xf32>
    %5 = vector.extract_strided_slice %1 {offsets = [0, 0], sizes = [1, 128], strides = [1, 1]} : vector<4x128xf32> to vector<1x128xf32>
    %6 = vector.broadcast %4 : vector<32x1xf32> to vector<32x128xf32>
    %7 = vector.broadcast %5 : vector<1x128xf32> to vector<32x128xf32>
    %8 = arith.mulf %6, %7 : vector<32x128xf32>
    %9 = vector.extract_strided_slice %3 {offsets = [0, 1], sizes = [32, 1], strides = [1, 1]} : vector<32x4xf32> to vector<32x1xf32>
    %10 = vector.extract_strided_slice %1 {offsets = [1, 0], sizes = [1, 128], strides = [1, 1]} : vector<4x128xf32> to vector<1x128xf32>
    %11 = vector.broadcast %9 : vector<32x1xf32> to vector<32x128xf32>
    %12 = vector.broadcast %10 : vector<1x128xf32> to vector<32x128xf32>
    %13 = arith.mulf %11, %12 : vector<32x128xf32>
    %14 = arith.addf %8, %13 : vector<32x128xf32>
    %15 = vector.extract_strided_slice %3 {offsets = [0, 2], sizes = [32, 1], strides = [1, 1]} : vector<32x4xf32> to vector<32x1xf32>
    %16 = vector.extract_strided_slice %1 {offsets = [2, 0], sizes = [1, 128], strides = [1, 1]} : vector<4x128xf32> to vector<1x128xf32>
    %17 = vector.broadcast %15 : vector<32x1xf32> to vector<32x128xf32>
    %18 = vector.broadcast %16 : vector<1x128xf32> to vector<32x128xf32>
    %19 = arith.mulf %17, %18 : vector<32x128xf32>
    %20 = arith.addf %14, %19 : vector<32x128xf32>
    %21 = vector.extract_strided_slice %3 {offsets = [0, 3], sizes = [32, 1], strides = [1, 1]} : vector<32x4xf32> to vector<32x1xf32>
    %22 = vector.extract_strided_slice %1 {offsets = [3, 0], sizes = [1, 128], strides = [1, 1]} : vector<4x128xf32> to vector<1x128xf32>
    %23 = vector.broadcast %21 : vector<32x1xf32> to vector<32x128xf32>
    %24 = vector.broadcast %22 : vector<1x128xf32> to vector<32x128xf32>
    %25 = arith.mulf %23, %24 : vector<32x128xf32>
    %26 = arith.addf %20, %25 : vector<32x128xf32>
    %c0_4 = arith.constant 0 : index
    %c0_5 = arith.constant 0 : index
    %27 = vector.load %arg4[%c0_4, %c0_5] : memref<32x1xf32, #tpu.memory_space<vmem>>, vector<32x1xf32>
    %28 = vector.broadcast %27 : vector<32x1xf32> to vector<32x128xf32>
    %29 = arith.addf %26, %28 : vector<32x128xf32>
    %cst = arith.constant 0.000000e+00 : f32
    %30 = vector.broadcast %cst : f32 to vector<32x128xf32>
    %31 = arith.maximumf %29, %30 : vector<32x128xf32>
    %c0_6 = arith.constant 0 : index
    %c0_7 = arith.constant 0 : index
    %32 = vector.load %arg5[%c0_6, %c0_7] : memref<32x32xbf16, #tpu.memory_space<vmem>>, vector<32x32xbf16>
    %33 = arith.truncf %31 : vector<32x128xf32> to vector<32x128xbf16>
    %cst_8 = arith.constant dense<0.000000e+00> : vector<32x128xf32>
    %34 = tpu.matmul %32, %33, %cst_8 {dimension_numbers = #tpu.dot_dimension_numbers<[1], [0], [0], [1], [0, 0, 1, 1], [], []>} : vector<32x32xbf16>, vector<32x128xbf16>, vector<32x128xf32> -> vector<32x128xf32>
    %c0_9 = arith.constant 0 : index
    %c0_10 = arith.constant 0 : index
    %35 = vector.load %arg6[%c0_9, %c0_10] : memref<32x1xf32, #tpu.memory_space<vmem>>, vector<32x1xf32>
    %36 = vector.broadcast %35 : vector<32x1xf32> to vector<32x128xf32>
    %37 = arith.addf %34, %36 : vector<32x128xf32>
    %cst_11 = arith.constant 0.000000e+00 : f32
    %38 = vector.broadcast %cst_11 : f32 to vector<32x128xf32>
    %39 = arith.maximumf %37, %38 : vector<32x128xf32>
    %c0_12 = arith.constant 0 : index
    %c0_13 = arith.constant 0 : index
    %40 = vector.load %arg7[%c0_12, %c0_13] : memref<5x32xbf16, #tpu.memory_space<vmem>>, vector<5x32xbf16>
    %41 = arith.truncf %39 : vector<32x128xf32> to vector<32x128xbf16>
    %cst_14 = arith.constant dense<0.000000e+00> : vector<5x128xf32>
    %42 = tpu.matmul %40, %41, %cst_14 {dimension_numbers = #tpu.dot_dimension_numbers<[1], [0], [0], [1], [0, 0, 1, 1], [], []>} : vector<5x32xbf16>, vector<32x128xbf16>, vector<5x128xf32> -> vector<5x128xf32>
    %c0_15 = arith.constant 0 : index
    %c0_16 = arith.constant 0 : index
    %43 = vector.load %arg8[%c0_15, %c0_16] : memref<5x1xf32, #tpu.memory_space<vmem>>, vector<5x1xf32>
    %44 = vector.broadcast %43 : vector<5x1xf32> to vector<5x128xf32>
    %45 = arith.addf %42, %44 : vector<5x128xf32>
    %c0_17 = arith.constant 0 : index
    %c0_18 = arith.constant 0 : index
    %c0_19 = arith.constant 0 : index
    %46 = vector.load %arg9[%c0_17, %c0_18, %c0_19] : memref<1x5x128xf32, #tpu.memory_space<vmem>>, vector<1x5x128xf32>
    %47 = vector.shape_cast %46 : vector<1x5x128xf32> to vector<5x128xf32>
    %48 = vector.shape_cast %45 : vector<5x128xf32> to vector<1x5x128xf32>
    tpu.vector_store %arg9[%c0_17, %c0_18, %c0_19], %48 {strides = array<i32>} : memref<1x5x128xf32, #tpu.memory_space<vmem>>, vector<1x5x128xf32>,
    return
  }
  func.func @transform_0(%arg0: i32, %arg1: i32) -> (i32, i32, i32) {
    %c0_i32 = arith.constant 0 : i32
    %c0_i32_0 = arith.constant 0 : i32
    return %arg0, %c0_i32, %arg1 : i32, i32, i32
  }
  func.func @transform_1(%arg0: i32, %arg1: i32) -> (i32, i32) {
    %c0_i32 = arith.constant 0 : i32
    %c0_i32_0 = arith.constant 0 : i32
    %c0_i32_1 = arith.constant 0 : i32
    return %c0_i32, %c0_i32_0 : i32, i32
  }
  func.func @transform_2(%arg0: i32, %arg1: i32) -> (i32, i32) {
    %c0_i32 = arith.constant 0 : i32
    %c0_i32_0 = arith.constant 0 : i32
    %c0_i32_1 = arith.constant 0 : i32
    return %c0_i32, %c0_i32_0 : i32, i32
  }
  func.func @transform_3(%arg0: i32, %arg1: i32) -> (i32, i32) {
    %c0_i32 = arith.constant 0 : i32
    %c0_i32_0 = arith.constant 0 : i32
    %c0_i32_1 = arith.constant 0 : i32
    return %c0_i32, %c0_i32_0 : i32, i32
  }
  func.func @transform_4(%arg0: i32, %arg1: i32) -> (i32, i32) {
    %c0_i32 = arith.constant 0 : i32
    %c0_i32_0 = arith.constant 0 : i32
    %c0_i32_1 = arith.constant 0 : i32
    return %c0_i32, %c0_i32_0 : i32, i32
  }
  func.func @transform_5(%arg0: i32, %arg1: i32) -> (i32, i32) {
    %c0_i32 = arith.constant 0 : i32
    %c0_i32_0 = arith.constant 0 : i32
    %c0_i32_1 = arith.constant 0 : i32
    return %c0_i32, %c0_i32_0 : i32, i32
  }
  func.func @transform_6(%arg0: i32, %arg1: i32) -> (i32, i32) {
    %c0_i32 = arith.constant 0 : i32
    %c0_i32_0 = arith.constant 0 : i32
    %c0_i32_1 = arith.constant 0 : i32
    return %c0_i32, %c0_i32_0 : i32, i32
  }
  func.func @transform_7(%arg0: i32, %arg1: i32) -> (i32, i32, i32) {
    %c0_i32 = arith.constant 0 : i32
    %c0_i32_0 = arith.constant 0 : i32
    return %arg0, %c0_i32, %arg1 : i32, i32, i32
  }
}

</mosaic_0001>

<llo_original>
// kernel: tpu_custom_call.1
$region0: #{tpu_custom_call.1}
  #allocation0 [shape = 'u32[]', space=smem, size = 0x4, offset = 0x4, fixed_abs, tag = 'smem constant byte address 0x4 - core index']
  #allocation1 [shape = 'u32[144,128]{1,0:T(1,128)}', space=vmem, size = 0x12000, scoped, tag = 'internal scratch']
  %s0 = inlined_call_operand.vmem [shape: f32[2,4,128], index: 0, kind: input, shape index: {}]
  %s1 = inlined_call_operand.vmem [shape: bf16[32,4], index: 1, kind: input, shape index: {}]
  %s2 = inlined_call_operand.vmem [shape: f32[32,1], index: 2, kind: input, shape index: {}]
  %s3 = inlined_call_operand.vmem [shape: bf16[32,32], index: 3, kind: input, shape index: {}]
  %s4 = inlined_call_operand.vmem [shape: f32[32,1], index: 4, kind: input, shape index: {}]
  %s5 = inlined_call_operand.vmem [shape: bf16[5,32], index: 5, kind: input, shape index: {}]
  %s6 = inlined_call_operand.vmem [shape: f32[5,1], index: 6, kind: input, shape index: {}]
  %s7 = inlined_call_operand.vmem [shape: f32[2,5,128], index: 7, kind: output, shape index: {}]
  %s8 = sld [smem:[#allocation0]]
  $region61: #{tpu_custom_call.1} parent=0
    _
  %s10 = ssub.s32 1, %s8
  %s11 = scalar_select 0, %s10, %s8
  loop: start=0, step=1, limit=4
  $region2: #{tpu_custom_call.1} parent=0 // loop_pre_header
    _
  $region3: #{tpu_custom_call.1} parent=0 // loop_header
    %s13 = sphi 0, %s17
    %p14 = scmp.ge.s32.totalorder %s13, 4
    %s20 = sphi 0, %s32
    %s21 = sphi 0, %s28
    %s22 = sphi 0, %s20
    %s23 = sphi 0, %s21
    %s24 = sphi 0, %s22
    %s25 = sphi 0, %s23
    %s37 = sphi 0, %s39
    %s40 = sphi 0, %s37
    %s41 = sphi 0, %s40
    %s57 = sphi 0, %s41
    %s61 = sphi 0, %s61
    %s63 = sphi 0, %s61
    %s64 = sphi 0, %s63
    %s78 = sphi 0, %s64
    %s82 = sphi 0, %s82
    %s84 = sphi 0, %s82
    %s85 = sphi 0, %s84
    %s99 = sphi 0, %s85
    %s103 = sphi 0, %s103
    %s105 = sphi 0, %s103
    %s106 = sphi 0, %s105
    %s120 = sphi 0, %s106
    %s124 = sphi 0, %s124
    %s126 = sphi 0, %s124
    %s127 = sphi 0, %s126
    %s141 = sphi 0, %s127
    %s145 = sphi 0, %s145
    %s147 = sphi 0, %s145
    %s148 = sphi 0, %s147
    %s162 = sphi 0, %s148
    %s166 = sphi 0, %s166
    %s168 = sphi 0, %s166
    %s169 = sphi 0, %s168
    %s183 = sphi 0, %s169
    %s191 = sphi 0, %s193
    %s194 = sphi 0, %s191
    %s195 = sphi 0, %s194
    %s211 = sphi 0, %s195
  $region4: #{tpu_custom_call.1} parent=0 // loop_header_branch
    %16 = sbr.rel (%p14) target = $region8
  $region5: #{tpu_custom_call.1} parent=0 // loop_body
    %s18 = ssub.s32 %s13, 1
    %s19 = ssub.s32 %s13, 2
    %s26 = sadd.s32 1, %s21
    %p27 = scmp.ge.s32.totalorder %s26, 1
    %s28 = scalar_select %p27, 0, %s26
    %s29 = sadd.s32 1, %s20
    %s30 = scalar_select %p27, %s29, %s20
    %p31 = scmp.ge.s32.totalorder %s30, 2
    %s32 = scalar_select %p31, 0, %s30
    %s33 = ssub.s32 %s20, %s32
    %s34 = ssub.s32 %s21, %s28
    %s35 = sor.u32 %s33, %s34
    %p36 = scmp.eq.s32.totalorder %s35, 0
    %s38 = sadd.s32 %s37, 1
    %s39 = scalar_select %p36, %s37, %s38
    %p42 = pneg %p36
    %p43 = scmp.eq.s32.totalorder %s13, 1
    %p44 = por %p42, %p43
    %p45 = scmp.ne.s32.totalorder %s37, %s40
    %p46 = scmp.eq.s32.totalorder %s13, 0
    %p47 = por %p45, %p46
    %p48 = scmp.ne.s32.totalorder %s37, %s40
    %p49 = scmp.eq.s32.totalorder %s18, 1
    %p50 = por %p48, %p49
    %p51 = scmp.ne.s32.totalorder %s40, %s41
    %p52 = scmp.eq.s32.totalorder %s18, 0
    %p53 = por %p51, %p52
    %p54 = scmp.ne.s32.totalorder %s40, %s41
    %p55 = scmp.eq.s32.totalorder %s19, 1
    %p56 = por %p54, %p55
    %p58 = scmp.ne.s32.totalorder %s41, %s57
    %p59 = scmp.eq.s32.totalorder %s19, 0
    %p60 = por %p58, %p59
    %s62 = sadd.s32 %s61, 1
    %p65 = scmp.eq.s32.totalorder %s13, 1
    %p66 = scmp.ne.s32.totalorder %s61, %s63
    %p67 = scmp.eq.s32.totalorder %s13, 0
    %p68 = por %p66, %p67
    %p69 = scmp.ne.s32.totalorder %s61, %s63
    %p70 = scmp.eq.s32.totalorder %s18, 1
    %p71 = por %p69, %p70
    %p72 = scmp.ne.s32.totalorder %s63, %s64
    %p73 = scmp.eq.s32.totalorder %s18, 0
    %p74 = por %p72, %p73
    %p75 = scmp.ne.s32.totalorder %s63, %s64
    %p76 = scmp.eq.s32.totalorder %s19, 1
    %p77 = por %p75, %p76
    %p79 = scmp.ne.s32.totalorder %s64, %s78
    %p80 = scmp.eq.s32.totalorder %s19, 0
    %p81 = por %p79, %p80
    %s83 = sadd.s32 %s82, 1
    %p86 = scmp.eq.s32.totalorder %s13, 1
    %p87 = scmp.ne.s32.totalorder %s82, %s84
    %p88 = scmp.eq.s32.totalorder %s13, 0
    %p89 = por %p87, %p88
    %p90 = scmp.ne.s32.totalorder %s82, %s84
    %p91 = scmp.eq.s32.totalorder %s18, 1
    %p92 = por %p90, %p91
    %p93 = scmp.ne.s32.totalorder %s84, %s85
    %p94 = scmp.eq.s32.totalorder %s18, 0
    %p95 = por %p93, %p94
    %p96 = scmp.ne.s32.totalorder %s84, %s85
    %p97 = scmp.eq.s32.totalorder %s19, 1
    %p98 = por %p96, %p97
    %p100 = scmp.ne.s32.totalorder %s85, %s99
    %p101 = scmp.eq.s32.totalorder %s19, 0
    %p102 = por %p100, %p101
    %s104 = sadd.s32 %s103, 1
    %p107 = scmp.eq.s32.totalorder %s13, 1
    %p108 = scmp.ne.s32.totalorder %s103, %s105
    %p109 = scmp.eq.s32.totalorder %s13, 0
    %p110 = por %p108, %p109
    %p111 = scmp.ne.s32.totalorder %s103, %s105
    %p112 = scmp.eq.s32.totalorder %s18, 1
    %p113 = por %p111, %p112
    %p114 = scmp.ne.s32.totalorder %s105, %s106
    %p115 = scmp.eq.s32.totalorder %s18, 0
    %p116 = por %p114, %p115
    %p117 = scmp.ne.s32.totalorder %s105, %s106
    %p118 = scmp.eq.s32.totalorder %s19, 1
    %p119 = por %p117, %p118
    %p121 = scmp.ne.s32.totalorder %s106, %s120
    %p122 = scmp.eq.s32.totalorder %s19, 0
    %p123 = por %p121, %p122
    %s125 = sadd.s32 %s124, 1
    %p128 = scmp.eq.s32.totalorder %s13, 1
    %p129 = scmp.ne.s32.totalorder %s124, %s126
    %p130 = scmp.eq.s32.totalorder %s13, 0
    %p131 = por %p129, %p130
    %p132 = scmp.ne.s32.totalorder %s124, %s126
    %p133 = scmp.eq.s32.totalorder %s18, 1
    %p134 = por %p132, %p133
    %p135 = scmp.ne.s32.totalorder %s126, %s127
    %p136 = scmp.eq.s32.totalorder %s18, 0
    %p137 = por %p135, %p136
    %p138 = scmp.ne.s32.totalorder %s126, %s127
    %p139 = scmp.eq.s32.totalorder %s19, 1
    %p140 = por %p138, %p139
    %p142 = scmp.ne.s32.totalorder %s127, %s141
    %p143 = scmp.eq.s32.totalorder %s19, 0
    %p144 = por %p142, %p143
    %s146 = sadd.s32 %s145, 1
    %p149 = scmp.eq.s32.totalorder %s13, 1
    %p150 = scmp.ne.s32.totalorder %s145, %s147
    %p151 = scmp.eq.s32.totalorder %s13, 0
    %p152 = por %p150, %p151
    %p153 = scmp.ne.s32.totalorder %s145, %s147
    %p154 = scmp.eq.s32.totalorder %s18, 1
    %p155 = por %p153, %p154
    %p156 = scmp.ne.s32.totalorder %s147, %s148
    %p157 = scmp.eq.s32.totalorder %s18, 0
    %p158 = por %p156, %p157
    %p159 = scmp.ne.s32.totalorder %s147, %s148
    %p160 = scmp.eq.s32.totalorder %s19, 1
    %p161 = por %p159, %p160
    %p163 = scmp.ne.s32.totalorder %s148, %s162
    %p164 = scmp.eq.s32.totalorder %s19, 0
    %p165 = por %p163, %p164
    %s167 = sadd.s32 %s166, 1
    %p170 = scmp.eq.s32.totalorder %s13, 1
    %p171 = scmp.ne.s32.totalorder %s166, %s168
    %p172 = scmp.eq.s32.totalorder %s13, 0
    %p173 = por %p171, %p172
    %p174 = scmp.ne.s32.totalorder %s166, %s168
    %p175 = scmp.eq.s32.totalorder %s18, 1
    %p176 = por %p174, %p175
    %p177 = scmp.ne.s32.totalorder %s168, %s169
    %p178 = scmp.eq.s32.totalorder %s18, 0
    %p179 = por %p177, %p178
    %p180 = scmp.ne.s32.totalorder %s168, %s169
    %p181 = scmp.eq.s32.totalorder %s19, 1
    %p182 = por %p180, %p181
    %p184 = scmp.ne.s32.totalorder %s169, %s183
    %p185 = scmp.eq.s32.totalorder %s19, 0
    %p186 = por %p184, %p185
    %s187 = ssub.s32 %s20, %s32
    %s188 = ssub.s32 %s21, %s28
    %s189 = sor.u32 %s187, %s188
    %p190 = scmp.eq.s32.totalorder %s189, 0
    %s192 = sadd.s32 %s191, 1
    %s193 = scalar_select %p190, %s191, %s192
    %p196 = pneg %p190
    %p197 = scmp.eq.s32.totalorder %s13, 1
    %p198 = por %p196, %p197
    %p199 = scmp.ne.s32.totalorder %s191, %s194
    %p200 = scmp.eq.s32.totalorder %s13, 0
    %p201 = por %p199, %p200
    %p202 = scmp.ne.s32.totalorder %s191, %s194
    %p203 = scmp.eq.s32.totalorder %s18, 1
    %p204 = por %p202, %p203
    %p205 = scmp.ne.s32.totalorder %s194, %s195
    %p206 = scmp.eq.s32.totalorder %s18, 0
    %p207 = por %p205, %p206
    %p208 = scmp.ne.s32.totalorder %s194, %s195
    %p209 = scmp.eq.s32.totalorder %s19, 1
    %p210 = por %p208, %p209
    %p212 = scmp.ne.s32.totalorder %s195, %s211
    %p213 = scmp.eq.s32.totalorder %s19, 0
    %p214 = por %p212, %p213
    %p215 = scmp.le.s32.totalorder 1, %s13
    %p216 = scmp.lt.s32.totalorder %s13, 3
    %p217 = pnand %p215, %p216
    %p218 = pneg %p217
    // Predicated region
    $region9: #{tpu_custom_call.1} parent=5 // pred_check
      _
    $region10: #{tpu_custom_call.1} parent=5 // pred_check_branch
      %220 = sbr.rel (%p217) target = $region12
    $region11: #{tpu_custom_call.1} parent=5 // pred_region
      %s221 = ssub.s32 %s13, 1
      // Predicated region
      $region13: #{tpu_custom_call.1} parent=11 // pred_check
        %p222 = pneg %p74
      $region14: #{tpu_custom_call.1} parent=11 // pred_check_branch
        %224 = sbr.rel (%p222) target = $region16
      $region15: #{tpu_custom_call.1} parent=11 // pred_region
        _
      $region16: #{tpu_custom_call.1} parent=11 // pred_fallthru
        _
      // Predicated region
      $region17: #{tpu_custom_call.1} parent=11 // pred_check
        %p225 = pneg %p95
      $region18: #{tpu_custom_call.1} parent=11 // pred_check_branch
        %227 = sbr.rel (%p225) target = $region20
      $region19: #{tpu_custom_call.1} parent=11 // pred_region
        _
      $region20: #{tpu_custom_call.1} parent=11 // pred_fallthru
        _
      // Predicated region
      $region21: #{tpu_custom_call.1} parent=11 // pred_check
        %p228 = pneg %p116
      $region22: #{tpu_custom_call.1} parent=11 // pred_check_branch
        %230 = sbr.rel (%p228) target = $region24
      $region23: #{tpu_custom_call.1} parent=11 // pred_region
        _
      $region24: #{tpu_custom_call.1} parent=11 // pred_fallthru
        _
      // Predicated region
      $region25: #{tpu_custom_call.1} parent=11 // pred_check
        %p231 = pneg %p137
      $region26: #{tpu_custom_call.1} parent=11 // pred_check_branch
        %233 = sbr.rel (%p231) target = $region28
      $region27: #{tpu_custom_call.1} parent=11 // pred_region
        _
      $region28: #{tpu_custom_call.1} parent=11 // pred_fallthru
        _
      // Predicated region
      $region29: #{tpu_custom_call.1} parent=11 // pred_check
        %p234 = pneg %p158
      $region30: #{tpu_custom_call.1} parent=11 // pred_check_branch
        %236 = sbr.rel (%p234) target = $region32
      $region31: #{tpu_custom_call.1} parent=11 // pred_region
        _
      $region32: #{tpu_custom_call.1} parent=11 // pred_fallthru
        _
      // Predicated region
      $region33: #{tpu_custom_call.1} parent=11 // pred_check
        %p237 = pneg %p179
      $region34: #{tpu_custom_call.1} parent=11 // pred_check_branch
        %239 = sbr.rel (%p237) target = $region36
      $region35: #{tpu_custom_call.1} parent=11 // pred_region
        _
      $region36: #{tpu_custom_call.1} parent=11 // pred_fallthru
        _
    $region12: #{tpu_custom_call.1} parent=5 // pred_fallthru
      _
    %p240 = scmp.lt.s32.totalorder %s13, 2
    // Predicated region
    $region37: #{tpu_custom_call.1} parent=5 // pred_check
      %p241 = pneg %p240
    $region38: #{tpu_custom_call.1} parent=5 // pred_check_branch
      %243 = sbr.rel (%p241) target = $region40
    $region39: #{tpu_custom_call.1} parent=5 // pred_region
      // Predicated region
      $region41: #{tpu_custom_call.1} parent=39 // pred_check
        %p244 = pneg %p47
      $region42: #{tpu_custom_call.1} parent=39 // pred_check_branch
        %246 = sbr.rel (%p244) target = $region44
      $region43: #{tpu_custom_call.1} parent=39 // pred_region
        %p247 = scmp.lt.s32.totalorder %s20, 1
        %s248 = scalar_select %p247, %s20, 1
        %p249 = scmp.lt.s32.totalorder %s21, 0
        %s250 = scalar_select %p249, %s21, 0
        %s251 = sadd.s32 %s250, %s248
        %s252 = smul.addr %s251, 4
        %s253 = scalar_lea.vmem %s0, %s252
      $region44: #{tpu_custom_call.1} parent=39 // pred_fallthru
        _
    $region40: #{tpu_custom_call.1} parent=5 // pred_fallthru
      _
    %p254 = scmp.le.s32.totalorder 1, %s13
    %p255 = scmp.lt.s32.totalorder %s13, 3
    %p256 = pnand %p254, %p255
    %p257 = pneg %p256
    // Predicated region
    $region45: #{tpu_custom_call.1} parent=5 // pred_check
      _
    $region46: #{tpu_custom_call.1} parent=5 // pred_check_branch
      %259 = sbr.rel (%p256) target = $region48
    $region47: #{tpu_custom_call.1} parent=5 // pred_region
      %s260 = ssub.s32 %s13, 1
      %p261 = scmp.lt.s32.totalorder %s22, 1
      %s262 = scalar_select %p261, %s22, 1
      %p263 = scmp.lt.s32.totalorder %s23, 0
      %s264 = scalar_select %p263, %s23, 0
      %s265 = sadd.s32 %s264, %s262
      %s266 = smul.addr %s265, 4
      %s267 = scalar_lea.vmem %s0, %s266
      %p268 = pneg %p53
      %p269 = pneg %p50
      %p270 = pneg %p74
      %p271 = pneg %p71
      %p272 = pneg %p95
      %p273 = pneg %p92
      %p274 = pneg %p116
      %p275 = pneg %p113
      %p276 = pneg %p137
      %p277 = pneg %p134
      %p278 = pneg %p158
      %p279 = pneg %p155
      %p280 = pneg %p179
      %p281 = pneg %p176
      %p282 = pneg %p207
      %p283 = pneg %p204
      %p284 = scmp.lt.s32.totalorder %s22, 1
      %s285 = scalar_select %p284, %s22, 1
      %p286 = scmp.lt.s32.totalorder %s23, 0
      %s287 = scalar_select %p286, %s23, 0
      %s288 = sadd.s32 %s287, %s285
      %s289 = smul.addr %s288, 8
      %s290 = scalar_lea.vmem %s7, %s289
      %p291 = scmp.lt.s32.totalorder %s22, 1
      %s292 = scalar_select %p291, %s22, 1
      %p293 = scmp.lt.s32.totalorder %s23, 0
      %s294 = scalar_select %p293, %s23, 0
      %s295 = sadd.s32 %s294, %s292
      %s296 = smul.addr %s295, 4
      %s297 = scalar_lea.vmem %s0, %s296
      %p298 = scmp.lt.s32.totalorder %s22, 1
      %s299 = scalar_select %p298, %s22, 1
      %p300 = scmp.lt.s32.totalorder %s23, 0
      %s301 = scalar_select %p300, %s23, 0
      %s302 = sadd.s32 %s301, %s299
      %s303 = smul.addr %s302, 8
      %s304 = scalar_lea.vmem %s7, %s303
      %v306 = vld [vmem:[%s297] sm:$0xf]
      %v307 = vld [vmem:[%s1] sm:$0xf]
      %v308 = vld [vmem:[%s1 + $0x4] sm:$0xf]
      %v309 = vld [vmem:[%s1 + $0x8] sm:$0xf]
      %v310 = vld [vmem:[%s1 + $0xc] sm:$0xf]
      %v311 = vunpack.c.l.bf16 %v307
      %v312 = vunpack.c.l.bf16 %v308
      %v313 = vunpack.c.l.bf16 %v309
      %v314 = vunpack.c.l.bf16 %v310
      %316 = vset.pattern.permute.xlu0 0
      %317 = vperm.xlu0 %316, %v311
      %v318 = vpop.permute.xlu0 %317
      %321 = vset.pattern.permute.xlu0 0
      %322 = vperm.xlu0 %321, %v312
      %v323 = vpop.permute.xlu0 %322
      %326 = vset.pattern.permute.xlu0 0
      %327 = vperm.xlu0 %326, %v313
      %v328 = vpop.permute.xlu0 %327
      %331 = vset.pattern.permute.xlu0 0
      %332 = vperm.xlu0 %331, %v314
      %v333 = vpop.permute.xlu0 %332
      %v335 = vlaneseq
      %v336 = vshrl.u32 %v335, 7
      %v337 = vsub.s32 0, %v336
      %v338 = vrot.slane %v306, %v337
      %v339 = vmul.f32 %v318, %v338
      %v340 = vmul.f32 %v323, %v338
      %v341 = vmul.f32 %v328, %v338
      %v342 = vmul.f32 %v333, %v338
      %343 = vset.pattern.permute.xlu0 1
      %344 = vperm.xlu0 %343, %v311
      %v345 = vpop.permute.xlu0 %344
      %347 = vset.pattern.permute.xlu0 1
      %348 = vperm.xlu0 %347, %v312
      %v349 = vpop.permute.xlu0 %348
      %351 = vset.pattern.permute.xlu0 1
      %352 = vperm.xlu0 %351, %v313
      %v353 = vpop.permute.xlu0 %352
      %355 = vset.pattern.permute.xlu0 1
      %356 = vperm.xlu0 %355, %v314
      %v357 = vpop.permute.xlu0 %356
      %v359 = vlaneseq
      %v360 = vshrl.u32 %v359, 7
      %v361 = vsub.s32 1, %v360
      %v362 = vrot.slane %v306, %v361
      %v363 = vmul.f32 %v345, %v362
      %v364 = vmul.f32 %v349, %v362
      %v365 = vmul.f32 %v353, %v362
      %v366 = vmul.f32 %v357, %v362
      %v367 = vadd.f32 %v339, %v363
      %v368 = vadd.f32 %v340, %v364
      %v369 = vadd.f32 %v341, %v365
      %v370 = vadd.f32 %v342, %v366
      %371 = vset.pattern.permute.xlu0 2
      %372 = vperm.xlu0 %371, %v311
      %v373 = vpop.permute.xlu0 %372
      %375 = vset.pattern.permute.xlu0 2
      %376 = vperm.xlu0 %375, %v312
      %v377 = vpop.permute.xlu0 %376
      %379 = vset.pattern.permute.xlu0 2
      %380 = vperm.xlu0 %379, %v313
      %v381 = vpop.permute.xlu0 %380
      %383 = vset.pattern.permute.xlu0 2
      %384 = vperm.xlu0 %383, %v314
      %v385 = vpop.permute.xlu0 %384
      %v387 = vlaneseq
      %v388 = vshrl.u32 %v387, 7
      %v389 = vsub.s32 2, %v388
      %v390 = vrot.slane %v306, %v389
      %v391 = vmul.f32 %v373, %v390
      %v392 = vmul.f32 %v377, %v390
      %v393 = vmul.f32 %v381, %v390
      %v394 = vmul.f32 %v385, %v390
      %v395 = vadd.f32 %v367, %v391
      %v396 = vadd.f32 %v368, %v392
      %v397 = vadd.f32 %v369, %v393
      %v398 = vadd.f32 %v370, %v394
      %399 = vset.pattern.permute.xlu0 3
      %400 = vperm.xlu0 %399, %v311
      %v401 = vpop.permute.xlu0 %400
      %403 = vset.pattern.permute.xlu0 3
      %404 = vperm.xlu0 %403, %v312
      %v405 = vpop.permute.xlu0 %404
      %407 = vset.pattern.permute.xlu0 3
      %408 = vperm.xlu0 %407, %v313
      %v409 = vpop.permute.xlu0 %408
      %411 = vset.pattern.permute.xlu0 3
      %412 = vperm.xlu0 %411, %v314
      %v413 = vpop.permute.xlu0 %412
      %v415 = vlaneseq
      %v416 = vshrl.u32 %v415, 7
      %v417 = vsub.s32 3, %v416
      %v418 = vrot.slane %v306, %v417
      %v419 = vmul.f32 %v401, %v418
      %v420 = vmul.f32 %v405, %v418
      %v421 = vmul.f32 %v409, %v418
      %v422 = vmul.f32 %v413, %v418
      %v423 = vadd.f32 %v395, %v419
      %v424 = vadd.f32 %v396, %v420
      %v425 = vadd.f32 %v397, %v421
      %v426 = vadd.f32 %v398, %v422
      %v427 = vld [vmem:[%s2] sm:$0xff]
      %v428 = vld [vmem:[%s2 + $0x8] sm:$0xff]
      %v429 = vld [vmem:[%s2 + $0x10] sm:$0xff]
      %v430 = vld [vmem:[%s2 + $0x18] sm:$0xff]
      %432 = vset.pattern.permute.xlu0 0
      %433 = vperm.xlu0 %432, %v427
      %v434 = vpop.permute.xlu0 %433
      %437 = vset.pattern.permute.xlu0 0
      %438 = vperm.xlu0 %437, %v428
      %v439 = vpop.permute.xlu0 %438
      %442 = vset.pattern.permute.xlu0 0
      %443 = vperm.xlu0 %442, %v429
      %v444 = vpop.permute.xlu0 %443
      %447 = vset.pattern.permute.xlu0 0
      %448 = vperm.xlu0 %447, %v430
      %v449 = vpop.permute.xlu0 %448
      %v451 = vadd.f32 %v423, %v434
      %v452 = vadd.f32 %v424, %v439
      %v453 = vadd.f32 %v425, %v444
      %v454 = vadd.f32 %v426, %v449
      %v455 = vmax.f32 %v451, 0.0
      %v456 = vmax.f32 %v452, 0.0
      %v457 = vmax.f32 %v453, 0.0
      %v458 = vmax.f32 %v454, 0.0
      %v459 = vld [vmem:[%s3] sm:$0xf]
      %v460 = vld [vmem:[%s3 + $0x4] sm:$0xf]
      %v461 = vld [vmem:[%s3 + $0x8] sm:$0xf]
      %v462 = vld [vmem:[%s3 + $0xc] sm:$0xf]
      %v463 = vpack.c.bf16 %v456, %v455
      %v464 = vpack.c.bf16 %v458, %v457
      %v465 = vld [vmem:[%s4] sm:$0xff]
      %v466 = vld [vmem:[%s4 + $0x8] sm:$0xff]
      %v467 = vld [vmem:[%s4 + $0x10] sm:$0xff]
      %v468 = vld [vmem:[%s4 + $0x18] sm:$0xff]
      %470 = vset.pattern.permute.xlu0 0
      %471 = vperm.xlu0 %470, %v465
      %v472 = vpop.permute.xlu0 %471
      %475 = vset.pattern.permute.xlu0 0
      %476 = vperm.xlu0 %475, %v466
      %v477 = vpop.permute.xlu0 %476
      %480 = vset.pattern.permute.xlu0 0
      %481 = vperm.xlu0 %480, %v467
      %v482 = vpop.permute.xlu0 %481
      %485 = vset.pattern.permute.xlu0 0
      %486 = vperm.xlu0 %485, %v468
      %v487 = vpop.permute.xlu0 %486
      %v493 = vunpack.c.l.b16 %v459
      %v494 = vunpack.c.l.b16 %v460
      %v495 = vunpack.c.l.b16 %v461
      %v496 = vunpack.c.l.b16 %v462
      %v497 = vpack.c.b16 %v494, %v493
      %v498 = vpack.c.b16 %v496, %v495
      %vm499 = vcmask 261120
      %v501 = vsel %vm499, %v497, 0
      %v504 = vsel %vm499, %v498, 0
      %506 = vmatprep.subr.bf16.mxu0 0
      %507 = vmatpush1.bf16.msra.mxu0 0
      %508 = vmatprep.subr.bf16.mxu0 0
      %509 = vmatpush1.bf16.msra.mxu0 0
      %510 = vmatprep.subr.bf16.mxu0 0
      %511 = vmatpush1.bf16.msra.mxu0 0
      %512 = vmatprep.subr.bf16.mxu0 0
      %513 = vmatpush1.bf16.msra.mxu0 0
      %514 = vmatprep.subr.bf16.mxu0 0
      %515 = vmatpush1.bf16.msra.mxu0 0
      %516 = vmatprep.subr.bf16.mxu0 0
      %517 = vmatpush1.bf16.msra.mxu0 0
      %518 = vmatprep.subr.bf16.mxu0 0
      %519 = vmatpush1.bf16.msra.mxu0 %v464
      %520 = vmatprep.subr.bf16.mxu0 0
      %521 = vmatpush1.bf16.msra.mxu0 %v463
      %522 = vmatprep.subr.bf16.mxu0 0
      %523 = vmatpush2.bf16.msra.mxu0 0
      %524 = vmatprep.subr.bf16.mxu0 0
      %525 = vmatpush2.bf16.msra.mxu0 0
      %526 = vmatprep.subr.bf16.mxu0 0
      %527 = vmatpush2.bf16.msra.mxu0 0
      %528 = vmatprep.subr.bf16.mxu0 0
      %529 = vmatpush2.bf16.msra.mxu0 0
      %530 = vmatprep.subr.bf16.mxu0 0
      %531 = vmatpush2.bf16.msra.mxu0 0
      %532 = vmatprep.subr.bf16.mxu0 0
      %533 = vmatpush2.bf16.msra.mxu0 0
      %534 = vmatprep.subr.bf16.mxu0 0
      %535 = vmatpush2.bf16.msra.mxu0 0
      %536 = vmatprep.subr.bf16.mxu0 0
      %537 = vmatpush2.bf16.msra.mxu0 0
      %538 = vmatprep.mubr.bf16.mxu0 0
      %539 = vmatmul.mubr.bf16.gmra.mxu0 %v501
      %v540 = vpop.f32.mrf.mxu0
      %v541 = vadd.f32 %v472, %v540
      %v542 = vpop.f32.mrf.mxu0
      %v543 = vpop.f32.mrf.mxu0
      %v544 = vadd.f32 %v477, %v543
      %v545 = vpop.f32.mrf.mxu0
      %546 = vmatprep.mubr.bf16.mxu0 0
      %547 = vmatmul.mubr.bf16.gmra.mxu0 %v504
      %v548 = vpop.f32.mrf.mxu0
      %v549 = vadd.f32 %v482, %v548
      %v550 = vpop.f32.mrf.mxu0
      %v551 = vpop.f32.mrf.mxu0
      %v552 = vadd.f32 %v487, %v551
      %v553 = vpop.f32.mrf.mxu0
      %554 = vdwg.mxu0
      %v555 = vmax.f32 %v541, 0.0
      %v556 = vmax.f32 %v544, 0.0
      %v557 = vmax.f32 %v549, 0.0
      %v558 = vmax.f32 %v552, 0.0
      %v559 = vld [vmem:[%s5] sm:$0x7]
      %v560 = vpack.c.bf16 %v556, %v555
      %v561 = vpack.c.bf16 %v558, %v557
      %v562 = vld [vmem:[%s6] sm:$0x1f]
      %564 = vset.pattern.permute.xlu0 0
      %565 = vperm.xlu0 %564, %v562
      %v566 = vpop.permute.xlu0 %565
      %v569 = vsel %vm499, %v559, 0
      %571 = vmatprep.subr.bf16.mxu0 0
      %572 = vmatpush1.bf16.msra.mxu0 0
      %573 = vmatprep.subr.bf16.mxu0 0
      %574 = vmatpush1.bf16.msra.mxu0 0
      %575 = vmatprep.subr.bf16.mxu0 0
      %576 = vmatpush1.bf16.msra.mxu0 0
      %577 = vmatprep.subr.bf16.mxu0 0
      %578 = vmatpush1.bf16.msra.mxu0 0
      %579 = vmatprep.subr.bf16.mxu0 0
      %580 = vmatpush1.bf16.msra.mxu0 0
      %581 = vmatprep.subr.bf16.mxu0 0
      %582 = vmatpush1.bf16.msra.mxu0 0
      %583 = vmatprep.subr.bf16.mxu0 0
      %584 = vmatpush1.bf16.msra.mxu0 %v561
      %585 = vmatprep.subr.bf16.mxu0 0
      %586 = vmatpush1.bf16.msra.mxu0 %v560
      %587 = vmatprep.subr.bf16.mxu0 0
      %588 = vmatpush2.bf16.msra.mxu0 0
      %589 = vmatprep.subr.bf16.mxu0 0
      %590 = vmatpush2.bf16.msra.mxu0 0
      %591 = vmatprep.subr.bf16.mxu0 0
      %592 = vmatpush2.bf16.msra.mxu0 0
      %593 = vmatprep.subr.bf16.mxu0 0
      %594 = vmatpush2.bf16.msra.mxu0 0
      %595 = vmatprep.subr.bf16.mxu0 0
      %596 = vmatpush2.bf16.msra.mxu0 0
      %597 = vmatprep.subr.bf16.mxu0 0
      %598 = vmatpush2.bf16.msra.mxu0 0
      %599 = vmatprep.subr.bf16.mxu0 0
      %600 = vmatpush2.bf16.msra.mxu0 0
      %601 = vmatprep.subr.bf16.mxu0 0
      %602 = vmatpush2.bf16.msra.mxu0 0
      %603 = vmatprep.mubr.bf16.mxu0 0
      %604 = vmatmul.mubr.bf16.gmra.mxu0 %v569
      %v605 = vpop.f32.mrf.mxu0
      %v606 = vadd.f32 %v566, %v605
      %v607 = vpop.f32.mrf.mxu0
      %v608 = vpop.f32.mrf.mxu0
      %v609 = vpop.f32.mrf.mxu0
      %610 = vdwg.mxu0
      %611 = vst [vmem:[%s304] sm:$0x1f] %v606
      %p612 = scmp.lt.s32.totalorder %s22, 1
      %s613 = scalar_select %p612, %s22, 1
      %p614 = scmp.lt.s32.totalorder %s23, 0
      %s615 = scalar_select %p614, %s23, 0
      %s616 = sadd.s32 %s615, %s613
      %s617 = smul.addr %s616, 8
      %s618 = scalar_lea.vmem %s7, %s617
      // Predicated region
      $region49: #{tpu_custom_call.1} parent=47 // pred_check
        %p619 = pneg %p204
      $region50: #{tpu_custom_call.1} parent=47 // pred_check_branch
        %621 = sbr.rel (%p619) target = $region52
      $region51: #{tpu_custom_call.1} parent=47 // pred_region
        _
      $region52: #{tpu_custom_call.1} parent=47 // pred_fallthru
        _
    $region48: #{tpu_custom_call.1} parent=5 // pred_fallthru
      _
    %p622 = scmp.le.s32.totalorder 2, %s13
    // Predicated region
    $region53: #{tpu_custom_call.1} parent=5 // pred_check
      %p623 = pneg %p622
    $region54: #{tpu_custom_call.1} parent=5 // pred_check_branch
      %625 = sbr.rel (%p623) target = $region56
    $region55: #{tpu_custom_call.1} parent=5 // pred_region
      %s626 = ssub.s32 %s13, 2
      // Predicated region
      $region57: #{tpu_custom_call.1} parent=55 // pred_check
        %p627 = pneg %p210
      $region58: #{tpu_custom_call.1} parent=55 // pred_check_branch
        %629 = sbr.rel (%p627) target = $region60
      $region59: #{tpu_custom_call.1} parent=55 // pred_region
        %p630 = scmp.lt.s32.totalorder %s24, 1
        %s631 = scalar_select %p630, %s24, 1
        %p632 = scmp.lt.s32.totalorder %s25, 0
        %s633 = scalar_select %p632, %s25, 0
        %s634 = sadd.s32 %s633, %s631
        %s635 = smul.addr %s634, 8
        %s636 = scalar_lea.vmem %s7, %s635
      $region60: #{tpu_custom_call.1} parent=55 // pred_fallthru
        _
    $region56: #{tpu_custom_call.1} parent=5 // pred_fallthru
      _
  $region6: #{tpu_custom_call.1} parent=0 // loop_footer
    %s17 = sadd.s32 1, %s13
  $region7: #{tpu_custom_call.1} parent=0 // loop_footer_branch
    %12 = sbr.rel target = $region3
  $region8: #{tpu_custom_call.1} parent=0 // loop_exit
    _

</llo_original>
